<compile_context>
chip_gen: v6e
topology: v6e:2x2x1
jax: 0.10.0
libtpu: 0.0.40
codegen_flags: <defaults>
</compile_context>

<pallas_src>
import functools

import jax
import jax.numpy as jnp
import numpy as np
from jax.experimental import pallas as pl
from jax.experimental.pallas import tpu as pltpu


def _cdiv(a, b):
    return -(-a // b)


def _round_up(x, m):
    return ((x + m - 1) // m) * m


def _tpu_topology():
    """Returns (tensorcores_per_chip, per-TensorCore VMEM bytes)."""
    vmem = 64 << 20                      # conservative default (v7x per-TC)
    try:
        vmem = int(pltpu.get_tpu_info().vmem_capacity_bytes)
    except Exception:
        pass
    num_tc = 1
    try:
        kind = jax.devices()[0].device_kind.lower()
        if "v7" in kind:                 # 2-TC parts; v5e/v6e have a single TC
            num_tc = 2
    except Exception:
        pass
    if num_tc > 1:
        # get_tpu_info may report the chip-total figure; v7x has 64 MiB / TC.
        vmem = min(vmem, 64 << 20)
    return num_tc, vmem


def _ce_kernel(labels_ref, logits_ref, loss_ref, cnt_ref,
               m_ref, l_ref, p_ref, *, pad_id, tile_v, v_total, mask_cols):
    i = pl.program_id(1)                          # row block within this core
    v = pl.program_id(2)                          # vocab block
    n_v = pl.num_programs(2)

    # Zero this core's resident output block once.
    @pl.when(jnp.logical_and(i == 0, v == 0))
    def _():
        loss_ref[...] = jnp.zeros_like(loss_ref)
        cnt_ref[...] = jnp.zeros_like(cnt_ref)

    # Reset the online-logsumexp carry at the start of every row block.
    @pl.when(v == 0)
    def _():
        m_ref[...] = jnp.full_like(m_ref, -jnp.inf)
        l_ref[...] = jnp.zeros_like(l_ref)
        p_ref[...] = jnp.zeros_like(p_ref)

    labels = labels_ref[...]                      # (tile_n, 1) int32
    x = logits_ref[...]                           # (tile_n, tile_v), native dtype

    # Column ids within this vocab block, shared across rows: (1, tile_v).
    col = jax.lax.broadcasted_iota(jnp.int32, (1, tile_v), 1)

    if mask_cols:
        # Last vocab block overhangs V: knock the padding columns out of the
        # logsumexp.  (Static branch: only traced when V % tile_v != 0.)
        col_ok = (v * tile_v + col) < v_total
        x = jnp.where(col_ok, x, jnp.asarray(-jnp.inf, dtype=x.dtype))

    # ---- online logsumexp: max/compare in native dtype, subtract in f32 ----
    m_blk = jnp.max(x, axis=-1, keepdims=True).astype(jnp.float32)
    m_prev = m_ref[...]
    m_new = jnp.maximum(m_prev, m_blk)
    alpha = jnp.exp(m_prev - m_new)               # (tile_n, 1)
    l_ref[...] = alpha * l_ref[...] + jnp.sum(
        jnp.exp(x.astype(jnp.float32) - m_new), axis=-1, keepdims=True)
    m_ref[...] = m_new

    # ---- picked logit: the label hits exactly one vocab block --------------
    hit = col == (labels - v * tile_v)            # (tile_n, tile_v) bool
    p_ref[...] += jnp.sum(
        jnp.where(hit, x, jnp.zeros((), dtype=x.dtype)),
        axis=-1, keepdims=True).astype(jnp.float32)

    # ---- finish the row block: per-row loss into the resident output -------
    @pl.when(v == n_v - 1)
    def _():
        per_row = m_ref[...] + jnp.log(l_ref[...]) - p_ref[...]   # (tile_n, 1)
        valid = labels != pad_id
        # NOTE: this must stay a *select*; padded tail rows can hold NaN/Inf
        # (uninitialized block overhang) and the select drops them.  Do NOT
        # refactor to `per_row * valid`.
        loss_ref[...] += jnp.where(valid, per_row, 0.0)
        cnt_ref[...] += valid.astype(jnp.float32)


def loss_pipeline_layer(logits, labels, pad_id, *,
                        tile_n_max=1024, tile_v_max=2048):
    """Mean shifted cross-entropy over non-pad tokens.

    logits: [B, S, V] (any float dtype; kept native through the DMA)
    labels: [B, S]    int
    """
    B, S, V = logits.shape
    N = B * S
    itemsize = jnp.dtype(logits.dtype).itemsize

    num_cores, vmem_cap = _tpu_topology()

    # ---- vocab tiling -------------------------------------------------------
    tile_v_max = max(128, (tile_v_max // 128) * 128)
    if V <= tile_v_max:
        tile_v = V                       # full-extent block: any V is legal
    else:
        tile_v = tile_v_max              # multiple of 128
    v_steps = _cdiv(V, tile_v)
    mask_cols = (v_steps * tile_v) != V  # partial last vocab block

    # ---- row tiling against *per-TensorCore* VMEM ---------------------------
    # Per row: double-buffered native-dtype logits block plus roughly two f32
    # per-element intermediates the compiler may materialize (exp in/out).
    # Keep ~40% headroom for everything else.
    bytes_per_row = tile_v * (2 * itemsize + 2 * 4)
    tile_n = int(vmem_cap * 0.6) // max(1, bytes_per_row)
    tile_n = max(8, min(tile_n_max, (tile_n // 8) * 8))
    tile_n = max(8, min(tile_n, _round_up(_cdiv(N, num_cores), 8)))

    row_blocks = _cdiv(N, tile_n)
    row_steps = _cdiv(row_blocks, num_cores)
    if num_cores > 1 and (num_cores - 1) * row_steps >= row_blocks:
        num_cores = 1                    # second core would only see pad rows
        row_steps = row_blocks
    Np = num_cores * row_steps * tile_n
    last_blk = row_blocks - 1            # last row block holding real logits
    assert Np >= N and Np == num_cores * row_steps * tile_n

    # ---- shift + pad labels only (tiny); logits are never copied ------------
    # All rows beyond N get exactly pad_id, which is what makes the clamped
    # out-of-range logits blocks below contribute nothing.
    labels = labels.astype(jnp.int32)
    shifted = jnp.concatenate(
        [labels[:, 1:], jnp.full((B, 1), pad_id, jnp.int32)], axis=1)
    flat_labels = shifted.reshape(-1)
    if Np != N:
        flat_labels = jnp.concatenate(
            [flat_labels, jnp.full((Np - N,), pad_id, jnp.int32)])
    labels_2d = flat_labels.reshape(Np, 1)
    flat_logits = logits.reshape(N, V)   # contiguous reshape: free

    kernel = functools.partial(_ce_kernel, pad_id=pad_id, tile_v=tile_v,
                               v_total=V, mask_cols=mask_cols)

    def label_block(c, i, v):
        # Same block index across the vocab axis -> the label DMA is skipped
        # while the kernel streams vocab blocks.
        return (c * row_steps + i, 0)

    def logits_block(c, i, v):
        # Out-of-range row blocks (core padding) clamp onto the last real
        # block; their labels are pad_id so they contribute nothing.
        return (jnp.minimum(c * row_steps + i, last_blk), v)

    cost = pl.CostEstimate(
        flops=int(6 * N * V),
        transcendentals=int(N * V),
        bytes_accessed=int(N * V * itemsize + Np * 4 + 2 * Np * 4),
    )

    # TODO(synk): add pipeline_mode=pl.Buffered(3) on the logits BlockSpec once
    # >2-deep buffering is reliably supported by top-level pallas_call.
    loss_parts, cnt_parts = pl.pallas_call(
        kernel,
        out_shape=(
            jax.ShapeDtypeStruct((num_cores * tile_n, 1), jnp.float32),
            jax.ShapeDtypeStruct((num_cores * tile_n, 1), jnp.float32),
        ),
        grid_spec=pltpu.PrefetchScalarGridSpec(
            num_scalar_prefetch=0,
            grid=(num_cores, row_steps, v_steps),
            in_specs=[
                pl.BlockSpec((tile_n, 1), label_block),
                pl.BlockSpec((tile_n, tile_v), logits_block),
            ],
            out_specs=[
                pl.BlockSpec((tile_n, 1), lambda c, i, v: (c, 0)),
                pl.BlockSpec((tile_n, 1), lambda c, i, v: (c, 0)),
            ],
            scratch_shapes=[
                pltpu.VMEM((tile_n, 1), jnp.float32),   # running row max
                pltpu.VMEM((tile_n, 1), jnp.float32),   # running sum-exp
                pltpu.VMEM((tile_n, 1), jnp.float32),   # picked logit
            ],
        ),
        compiler_params=pltpu.CompilerParams(
            dimension_semantics=("parallel", "arbitrary", "arbitrary"),
            vmem_limit_bytes=int(vmem_cap * 0.9)),
        cost_estimate=cost,
    )(labels_2d, flat_logits)

    # Tiny final reduction in JAX (also improves summation accuracy).
    return (jnp.sum(loss_parts) / jnp.sum(cnt_parts)).astype(jnp.float32)


def _reference_loss(logits, labels, pad_id):
    B, S, V = logits.shape
    sl = logits[:, :-1, :].reshape(-1, V).astype(jnp.float32)
    tl = labels[:, 1:].reshape(-1)
    logp = jax.nn.log_softmax(sl, axis=-1)
    picked = jnp.take_along_axis(
        logp, jnp.clip(tl, 0, V - 1)[:, None], axis=-1)[:, 0]
    valid = (tl != pad_id).astype(jnp.float32)
    return -jnp.sum(picked * valid) / jnp.sum(valid)


if __name__ == "__main__":
    key = jax.random.PRNGKey(0)
    pad_id = 0

    # --- test 1: f32 logits, single vocab block (tile_v == V) ---------------
    B, S, V = 2, 8, 128
    k1, k2 = jax.random.split(key)
    logits = jax.random.normal(k1, (B, S, V), dtype=jnp.float32)
    labels = jax.random.randint(k2, (B, S), 0, V, dtype=jnp.int32)
    labels = labels.at[0, 3].set(pad_id).at[1, 6].set(pad_id)
    loss = jax.block_until_ready(loss_pipeline_layer(logits, labels, pad_id))
    ref = jax.block_until_ready(_reference_loss(logits, labels, pad_id))
    np.testing.assert_allclose(np.asarray(loss), np.asarray(ref),
                               rtol=1e-5, atol=1e-5)

    # --- test 2: bf16 logits, multi-step online LSE, ragged row tail --------
    B2, S2, V2 = 3, 5, 512
    k3, k4 = jax.random.split(k1)
    logits2 = jax.random.normal(k3, (B2, S2, V2),
                                dtype=jnp.float32).astype(jnp.bfloat16)
    labels2 = jax.random.randint(k4, (B2, S2), 0, V2, dtype=jnp.int32)
    labels2 = labels2.at[1, 2].set(pad_id)
    loss2 = jax.block_until_ready(
        loss_pipeline_layer(logits2, labels2, pad_id, tile_v_max=128))
    ref2 = jax.block_until_ready(_reference_loss(logits2, labels2, pad_id))
    np.testing.assert_allclose(np.asarray(loss2), np.asarray(ref2),
                               rtol=1e-4, atol=1e-4)

    # --- test 3: vocab not divisible by the vocab tile (masked last block) --
    B3, S3, V3 = 2, 6, 320
    k5, k6 = jax.random.split(k3)
    logits3 = jax.random.normal(k5, (B3, S3, V3), dtype=jnp.float32)
    labels3 = jax.random.randint(k6, (B3, S3), 0, V3, dtype=jnp.int32)
    labels3 = labels3.at[0, 1].set(pad_id)
    loss3 = jax.block_until_ready(
        loss_pipeline_layer(logits3, labels3, pad_id, tile_v_max=128))
    ref3 = jax.block_until_ready(_reference_loss(logits3, labels3, pad_id))
    np.testing.assert_allclose(np.asarray(loss3), np.asarray(ref3),
                               rtol=1e-5, atol=1e-5)

    print("KERNEL_OK")
</pallas_src>

<mosaic_0001>
module attributes {stable_mosaic.version = 11 : i64} {
  func.func @_ce_kernel(%arg0: i32, %arg1: i32, %arg2: i32, %arg3: memref<16x1xi32, #tpu.memory_space<vmem>>, %arg4: memref<16x128xf32, #tpu.memory_space<vmem>>, %arg5: memref<16x1xf32, #tpu.memory_space<vmem>>, %arg6: memref<16x1xf32, #tpu.memory_space<vmem>>, %arg7: memref<16x1xf32, #tpu.memory_space<vmem>>, %arg8: memref<16x1xf32, #tpu.memory_space<vmem>>, %arg9: memref<16x1xf32, #tpu.memory_space<vmem>>) attributes {dimension_semantics = [#tpu.dimension_semantics<parallel>, #tpu.dimension_semantics<arbitrary>, #tpu.dimension_semantics<arbitrary>], iteration_bounds = array<i64: 1, 1, 1>, scalar_prefetch = 0 : i64, scratch_operands = 3 : i64, tpu.core_type = #tpu.core_type<tc>, window_params = [{transform_indices = @transform_0, window_bounds = array<i64: 16, 1>}, {transform_indices = @transform_1, window_bounds = array<i64: 16, 128>}, {transform_indices = @transform_2, window_bounds = array<i64: 16, 1>}, {transform_indices = @transform_3, window_bounds = array<i64: 16, 1>}]} {
    %c0_i32 = arith.constant 0 : i32
    %0 = arith.cmpi eq, %arg1, %c0_i32 : i32
    %c0_i32_0 = arith.constant 0 : i32
    %1 = arith.cmpi eq, %arg2, %c0_i32_0 : i32
    %2 = arith.andi %0, %1 : i1
    %3 = arith.extui %2 : i1 to i32
    %c0_i32_1 = arith.constant 0 : i32
    %4 = arith.cmpi ne, %3, %c0_i32_1 : i32
    scf.if %4 {
      %cst_24 = arith.constant 0.000000e+00 : f32
      %43 = vector.broadcast %cst_24 : f32 to vector<16x1xf32>
      %c0_25 = arith.constant 0 : index
      %c0_26 = arith.constant 0 : index
      %44 = vector.load %arg5[%c0_25, %c0_26] : memref<16x1xf32, #tpu.memory_space<vmem>>, vector<16x1xf32>
      tpu.vector_store %arg5[%c0_25, %c0_26], %43 {strides = array<i32>} : memref<16x1xf32, #tpu.memory_space<vmem>>, vector<16x1xf32>,
      %cst_27 = arith.constant 0.000000e+00 : f32
      %45 = vector.broadcast %cst_27 : f32 to vector<16x1xf32>
      %c0_28 = arith.constant 0 : index
      %c0_29 = arith.constant 0 : index
      %46 = vector.load %arg6[%c0_28, %c0_29] : memref<16x1xf32, #tpu.memory_space<vmem>>, vector<16x1xf32>
      tpu.vector_store %arg6[%c0_28, %c0_29], %45 {strides = array<i32>} : memref<16x1xf32, #tpu.memory_space<vmem>>, vector<16x1xf32>,
    } else {
    }
    %c0_i32_2 = arith.constant 0 : i32
    %5 = arith.cmpi eq, %arg2, %c0_i32_2 : i32
    %6 = arith.extui %5 : i1 to i32
    %c0_i32_3 = arith.constant 0 : i32
    %7 = arith.cmpi ne, %6, %c0_i32_3 : i32
    scf.if %7 {
      %cst_24 = arith.constant 0xFF800000 : f32
      %43 = vector.broadcast %cst_24 : f32 to vector<16x1xf32>
      %c0_25 = arith.constant 0 : index
      %c0_26 = arith.constant 0 : index
      %44 = vector.load %arg7[%c0_25, %c0_26] : memref<16x1xf32, #tpu.memory_space<vmem>>, vector<16x1xf32>
      tpu.vector_store %arg7[%c0_25, %c0_26], %43 {strides = array<i32>} : memref<16x1xf32, #tpu.memory_space<vmem>>, vector<16x1xf32>,
      %cst_27 = arith.constant 0.000000e+00 : f32
      %45 = vector.broadcast %cst_27 : f32 to vector<16x1xf32>
      %c0_28 = arith.constant 0 : index
      %c0_29 = arith.constant 0 : index
      %46 = vector.load %arg8[%c0_28, %c0_29] : memref<16x1xf32, #tpu.memory_space<vmem>>, vector<16x1xf32>
      tpu.vector_store %arg8[%c0_28, %c0_29], %45 {strides = array<i32>} : memref<16x1xf32, #tpu.memory_space<vmem>>, vector<16x1xf32>,
      %cst_30 = arith.constant 0.000000e+00 : f32
      %47 = vector.broadcast %cst_30 : f32 to vector<16x1xf32>
      %c0_31 = arith.constant 0 : index
      %c0_32 = arith.constant 0 : index
      %48 = vector.load %arg9[%c0_31, %c0_32] : memref<16x1xf32, #tpu.memory_space<vmem>>, vector<16x1xf32>
      tpu.vector_store %arg9[%c0_31, %c0_32], %47 {strides = array<i32>} : memref<16x1xf32, #tpu.memory_space<vmem>>, vector<16x1xf32>,
    } else {
    }
    %c0 = arith.constant 0 : index
    %c0_4 = arith.constant 0 : index
    %8 = vector.load %arg3[%c0, %c0_4] : memref<16x1xi32, #tpu.memory_space<vmem>>, vector<16x1xi32>
    %c0_5 = arith.constant 0 : index
    %c0_6 = arith.constant 0 : index
    %9 = vector.load %arg4[%c0_5, %c0_6] : memref<16x128xf32, #tpu.memory_space<vmem>>, vector<16x128xf32>
    %10 = tpu.iota {dimensions = array<i32: 1>} : vector<1x128xi32>
    %cst = arith.constant dense<0xFF800000> : vector<16xf32>
    %11 = vector.multi_reduction <maximumf>, %9, %cst [1] : vector<16x128xf32> to vector<16xf32>
    %12 = vector.shape_cast %11 : vector<16xf32> to vector<16x1xf32>
    %c0_7 = arith.constant 0 : index
    %c0_8 = arith.constant 0 : index
    %13 = vector.load %arg7[%c0_7, %c0_8] : memref<16x1xf32, #tpu.memory_space<vmem>>, vector<16x1xf32>
    %14 = arith.maximumf %13, %12 : vector<16x1xf32>
    %15 = arith.subf %13, %14 : vector<16x1xf32>
    %16 = math.exp %15 : vector<16x1xf32>
    %c0_9 = arith.constant 0 : index
    %c0_10 = arith.constant 0 : index
    %17 = vector.load %arg8[%c0_9, %c0_10] : memref<16x1xf32, #tpu.memory_space<vmem>>, vector<16x1xf32>
    %18 = arith.mulf %16, %17 : vector<16x1xf32>
    %19 = vector.broadcast %14 : vector<16x1xf32> to vector<16x128xf32>
    %20 = arith.subf %9, %19 : vector<16x128xf32>
    %21 = math.exp %20 : vector<16x128xf32>
    %cst_11 = arith.constant dense<0.000000e+00> : vector<16xf32>
    %22 = vector.multi_reduction <add>, %21, %cst_11 [1] : vector<16x128xf32> to vector<16xf32>
    %23 = vector.shape_cast %22 : vector<16xf32> to vector<16x1xf32>
    %24 = arith.addf %18, %23 : vector<16x1xf32>
    %c0_12 = arith.constant 0 : index
    %c0_13 = arith.constant 0 : index
    %25 = vector.load %arg8[%c0_12, %c0_13] : memref<16x1xf32, #tpu.memory_space<vmem>>, vector<16x1xf32>
    tpu.vector_store %arg8[%c0_12, %c0_13], %24 {strides = array<i32>} : memref<16x1xf32, #tpu.memory_space<vmem>>, vector<16x1xf32>,
    %c0_14 = arith.constant 0 : index
    %c0_15 = arith.constant 0 : index
    %26 = vector.load %arg7[%c0_14, %c0_15] : memref<16x1xf32, #tpu.memory_space<vmem>>, vector<16x1xf32>
    tpu.vector_store %arg7[%c0_14, %c0_15], %14 {strides = array<i32>} : memref<16x1xf32, #tpu.memory_space<vmem>>, vector<16x1xf32>,
    %c128_i32 = arith.constant 128 : i32
    %27 = arith.muli %arg2, %c128_i32 : i32
    %28 = vector.broadcast %27 : i32 to vector<16x1xi32>
    %29 = arith.subi %8, %28 : vector<16x1xi32>
    %30 = vector.broadcast %10 : vector<1x128xi32> to vector<16x128xi32>
    %31 = vector.broadcast %29 : vector<16x1xi32> to vector<16x128xi32>
    %32 = arith.cmpi eq, %30, %31 : vector<16x128xi32>
    %c0_16 = arith.constant 0 : index
    %c0_17 = arith.constant 0 : index
    %33 = vector.load %arg9[%c0_16, %c0_17] : memref<16x1xf32, #tpu.memory_space<vmem>>, vector<16x1xf32>
    %cst_18 = arith.constant 0.000000e+00 : f32
    %34 = vector.broadcast %cst_18 : f32 to vector<16x128xf32>
    %35 = arith.select %32, %9, %34 : vector<16x128xi1>, vector<16x128xf32>
    %cst_19 = arith.constant dense<0.000000e+00> : vector<16xf32>
    %36 = vector.multi_reduction <add>, %35, %cst_19 [1] : vector<16x128xf32> to vector<16xf32>
    %37 = vector.shape_cast %36 : vector<16xf32> to vector<16x1xf32>
    %38 = arith.addf %33, %37 : vector<16x1xf32>
    %c0_20 = arith.constant 0 : index
    %c0_21 = arith.constant 0 : index
    %39 = vector.load %arg9[%c0_20, %c0_21] : memref<16x1xf32, #tpu.memory_space<vmem>>, vector<16x1xf32>
    tpu.vector_store %arg9[%c0_20, %c0_21], %38 {strides = array<i32>} : memref<16x1xf32, #tpu.memory_space<vmem>>, vector<16x1xf32>,
    %c0_i32_22 = arith.constant 0 : i32
    %40 = arith.cmpi eq, %arg2, %c0_i32_22 : i32
    %41 = arith.extui %40 : i1 to i32
    %c0_i32_23 = arith.constant 0 : i32
    %42 = arith.cmpi ne, %41, %c0_i32_23 : i32
    scf.if %42 {
      %c0_24 = arith.constant 0 : index
      %c0_25 = arith.constant 0 : index
      %43 = vector.load %arg7[%c0_24, %c0_25] : memref<16x1xf32, #tpu.memory_space<vmem>>, vector<16x1xf32>
      %c0_26 = arith.constant 0 : index
      %c0_27 = arith.constant 0 : index
      %44 = vector.load %arg8[%c0_26, %c0_27] : memref<16x1xf32, #tpu.memory_space<vmem>>, vector<16x1xf32>
      %45 = math.log %44 : vector<16x1xf32>
      %46 = arith.addf %43, %45 : vector<16x1xf32>
      %c0_28 = arith.constant 0 : index
      %c0_29 = arith.constant 0 : index
      %47 = vector.load %arg9[%c0_28, %c0_29] : memref<16x1xf32, #tpu.memory_space<vmem>>, vector<16x1xf32>
      %48 = arith.subf %46, %47 : vector<16x1xf32>
      %c0_i32_30 = arith.constant 0 : i32
      %49 = vector.broadcast %c0_i32_30 : i32 to vector<16x1xi32>
      %50 = arith.cmpi ne, %8, %49 : vector<16x1xi32>
      %c0_31 = arith.constant 0 : index
      %c0_32 = arith.constant 0 : index
      %51 = vector.load %arg5[%c0_31, %c0_32] : memref<16x1xf32, #tpu.memory_space<vmem>>, vector<16x1xf32>
      %cst_33 = arith.constant 0.000000e+00 : f32
      %52 = vector.broadcast %cst_33 : f32 to vector<16x1xf32>
      %53 = arith.select %50, %48, %52 : vector<16x1xi1>, vector<16x1xf32>
      %54 = arith.addf %51, %53 : vector<16x1xf32>
      %c0_34 = arith.constant 0 : index
      %c0_35 = arith.constant 0 : index
      %55 = vector.load %arg5[%c0_34, %c0_35] : memref<16x1xf32, #tpu.memory_space<vmem>>, vector<16x1xf32>
      tpu.vector_store %arg5[%c0_34, %c0_35], %54 {strides = array<i32>} : memref<16x1xf32, #tpu.memory_space<vmem>>, vector<16x1xf32>,
      %c0_36 = arith.constant 0 : index
      %c0_37 = arith.constant 0 : index
      %56 = vector.load %arg6[%c0_36, %c0_37] : memref<16x1xf32, #tpu.memory_space<vmem>>, vector<16x1xf32>
      %57 = arith.extui %50 : vector<16x1xi1> to vector<16x1xi32>
      %58 = arith.sitofp %57 : vector<16x1xi32> to vector<16x1xf32>
      %59 = arith.addf %56, %58 : vector<16x1xf32>
      %c0_38 = arith.constant 0 : index
      %c0_39 = arith.constant 0 : index
      %60 = vector.load %arg6[%c0_38, %c0_39] : memref<16x1xf32, #tpu.memory_space<vmem>>, vector<16x1xf32>
      tpu.vector_store %arg6[%c0_38, %c0_39], %59 {strides = array<i32>} : memref<16x1xf32, #tpu.memory_space<vmem>>, vector<16x1xf32>,
    } else {
    }
    return
  }
  func.func @transform_0(%arg0: i32, %arg1: i32, %arg2: i32) -> (i32, i32) {
    %c1_i32 = arith.constant 1 : i32
    %0 = arith.muli %arg0, %c1_i32 : i32
    %1 = arith.addi %0, %arg1 : i32
    %c0_i32 = arith.constant 0 : i32
    %c0_i32_0 = arith.constant 0 : i32
    return %1, %c0_i32 : i32, i32
  }
  func.func @transform_1(%arg0: i32, %arg1: i32, %arg2: i32) -> (i32, i32) {
    %c1_i32 = arith.constant 1 : i32
    %0 = arith.muli %arg0, %c1_i32 : i32
    %1 = arith.addi %0, %arg1 : i32
    %c0_i32 = arith.constant 0 : i32
    %2 = arith.minsi %1, %c0_i32 : i32
    %c0_i32_0 = arith.constant 0 : i32
    return %2, %arg2 : i32, i32
  }
  func.func @transform_2(%arg0: i32, %arg1: i32, %arg2: i32) -> (i32, i32) {
    %c0_i32 = arith.constant 0 : i32
    %c0_i32_0 = arith.constant 0 : i32
    return %arg0, %c0_i32 : i32, i32
  }
  func.func @transform_3(%arg0: i32, %arg1: i32, %arg2: i32) -> (i32, i32) {
    %c0_i32 = arith.constant 0 : i32
    %c0_i32_0 = arith.constant 0 : i32
    return %arg0, %c0_i32 : i32, i32
  }
}

</mosaic_0001>

<llo_original>
// kernel: tpu_custom_call.1
$region0: #{tpu_custom_call.1}
  #allocation0 [shape = 'u32[]', space=smem, size = 0x4, offset = 0x4, fixed_abs, tag = 'smem constant byte address 0x4 - core index']
  #allocation1 [shape = 'u32[144,128]{1,0:T(1,128)}', space=vmem, size = 0x12000, scoped, tag = 'internal scratch']
  #allocation2 [shape = 'f32[16,1]{1,0:T(8,128)}', space=vmem, size = 0x2000, scoped, tag = 'scratch operand']
  #allocation3 [shape = 'f32[16,1]{1,0:T(8,128)}', space=vmem, size = 0x2000, scoped, tag = 'scratch operand']
  #allocation4 [shape = 'f32[16,1]{1,0:T(8,128)}', space=vmem, size = 0x2000, scoped, tag = 'scratch operand']
  %s0 = inlined_call_operand.vmem [shape: s32[16,1], index: 0, kind: input, shape index: {}]
  %s1 = inlined_call_operand.vmem [shape: f32[16,128], index: 1, kind: input, shape index: {}]
  %s2 = inlined_call_operand.vmem [shape: f32[16,1], index: 2, kind: output, shape index: {0}]
  %s3 = inlined_call_operand.vmem [shape: f32[16,1], index: 3, kind: output, shape index: {1}]
  %4 = xla_tuple %s2, %s3
  %s5 = sld [smem:[#allocation0]]
  $region38: #{tpu_custom_call.1} parent=0
    _
  %s7 = ssub.s32 1, %s5
  %s8 = scalar_select 0, %s7, %s5
  // Predicated region
  $region2: #{tpu_custom_call.1} parent=0 // pred_check
    _
  $region3: #{tpu_custom_call.1} parent=0 // pred_check_branch
    %10 = sbr.rel (0) target = $region5
  $region4: #{tpu_custom_call.1} parent=0 // pred_region
    %s11 = sadd.s32 0, 0
    %s12 = smul.u32 2, %s11
    %p13 = scmp.lt.s32.totalorder %s12, 1
    %s14 = scalar_select %p13, %s12, 1
    %s15 = smul.addr %s14, 8
    %s16 = scalar_lea.vmem %s0, %s15
    %s17 = sadd.s32 0, 0
    %s18 = smul.u32 2, %s17
  $region5: #{tpu_custom_call.1} parent=0 // pred_fallthru
    _
  // Predicated region
  $region6: #{tpu_custom_call.1} parent=0 // pred_check
    _
  $region7: #{tpu_custom_call.1} parent=0 // pred_check_branch
    %20 = sbr.rel (0) target = $region9
  $region8: #{tpu_custom_call.1} parent=0 // pred_region
    %s21 = sadd.s32 0, 0
    %p22 = scmp.lt.s32.totalorder %s21, 0
    %s23 = scalar_select %p22, %s21, 0
    %s24 = smul.u32 2, %s23
    %p25 = scmp.lt.s32.totalorder %s24, 1
    %s26 = scalar_select %p25, %s24, 1
    %s27 = smul.addr %s26, 8
    %s28 = scalar_lea.vmem %s1, %s27
    %s29 = sadd.s32 0, 0
    %p30 = scmp.lt.s32.totalorder %s29, 0
    %s31 = scalar_select %p30, %s29, 0
    %s32 = smul.u32 2, %s31
  $region9: #{tpu_custom_call.1} parent=0 // pred_fallthru
    _
  %s33 = sadd.s32 0, 0
  %s34 = smul.u32 2, %s33
  %p35 = scmp.lt.s32.totalorder %s34, 1
  %s36 = scalar_select %p35, %s34, 1
  %s37 = smul.addr %s36, 8
  %s38 = scalar_lea.vmem %s0, %s37
  %s39 = sadd.s32 0, 0
  %p40 = scmp.lt.s32.totalorder %s39, 0
  %s41 = scalar_select %p40, %s39, 0
  %s42 = smul.u32 2, %s41
  %p43 = scmp.lt.s32.totalorder %s42, 1
  %s44 = scalar_select %p43, %s42, 1
  %s45 = smul.addr %s44, 8
  %s46 = scalar_lea.vmem %s1, %s45
  %s47 = sadd.s32 0, 0
  %s48 = smul.u32 2, %s47
  %p49 = scmp.lt.s32.totalorder %s48, 1
  %s50 = scalar_select %p49, %s48, 1
  %s51 = smul.addr %s50, 8
  %s52 = scalar_lea.vmem %s0, %s51
  %s53 = sadd.s32 0, 0
  %s54 = smul.u32 2, %s53
  %s55 = sadd.s32 0, 0
  %p56 = scmp.lt.s32.totalorder %s55, 0
  %s57 = scalar_select %p56, %s55, 0
  %s58 = smul.u32 2, %s57
  %p59 = scmp.lt.s32.totalorder %s58, 1
  %s60 = scalar_select %p59, %s58, 1
  %s61 = smul.addr %s60, 8
  %s62 = scalar_lea.vmem %s1, %s61
  %s63 = sadd.s32 0, 0
  %p64 = scmp.lt.s32.totalorder %s63, 0
  %s65 = scalar_select %p64, %s63, 0
  %s66 = smul.u32 2, %s65
  %p67 = scmp.eq.s32.totalorder 0, 0
  %p68 = scmp.eq.s32.totalorder 0, 0
  %p69 = pnand %p67, %p68
  %p70 = pneg %p69
  // Predicated region
  $region10: #{tpu_custom_call.1} parent=0 // pred_check
    _
  $region11: #{tpu_custom_call.1} parent=0 // pred_check_branch
    %72 = sbr.rel (%p69) target = $region13
  $region12: #{tpu_custom_call.1} parent=0 // pred_region
    %vm73 = vcmask 7168
    %74 = vst.msk [vmem:[%s2] sm:$0xff] %vm73, 0.0
    %75 = vst.msk [vmem:[%s2 + $0x8] sm:$0xff] %vm73, 0.0
    %76 = vst.msk [vmem:[%s3] sm:$0xff] %vm73, 0.0
    %77 = vst.msk [vmem:[%s3 + $0x8] sm:$0xff] %vm73, 0.0
  $region13: #{tpu_custom_call.1} parent=0 // pred_fallthru
    _
  // Predicated region
  $region14: #{tpu_custom_call.1} parent=0 // pred_check
    %p78 = pneg %p68
  $region15: #{tpu_custom_call.1} parent=0 // pred_check_branch
    %80 = sbr.rel (%p78) target = $region17
  $region16: #{tpu_custom_call.1} parent=0 // pred_region
    %vm81 = vcmask 7168
    %82 = vst.msk [vmem:[#allocation2] sm:$0xff] %vm81, -inf
    %83 = vst.msk [vmem:[#allocation2 + $0x8] sm:$0xff] %vm81, -inf
    %84 = vst.msk [vmem:[#allocation3] sm:$0xff] %vm81, 0.0
    %85 = vst.msk [vmem:[#allocation3 + $0x8] sm:$0xff] %vm81, 0.0
    %86 = vst.msk [vmem:[#allocation4] sm:$0xff] %vm81, 0.0
    %87 = vst.msk [vmem:[#allocation4 + $0x8] sm:$0xff] %vm81, 0.0
  $region17: #{tpu_custom_call.1} parent=0 // pred_fallthru
    _
  %v88 = vld [vmem:[%s52] sm:$0xff]
  %v89 = vld [vmem:[%s52 + $0x8] sm:$0xff]
  %v90 = vld [vmem:[%s62] sm:$0xff]
  %v91 = vld [vmem:[%s62 + $0x8] sm:$0xff]
  %v92 = vlaneseq
  %v93 = vand.u32 %v92, 127
  %94 = vmax.xlane.f32.xlu0 %v90
  %v95 = vpop.xlane.xlu0 %94
  %96 = vmax.xlane.f32.xlu0 %v91
  %v97 = vpop.xlane.xlu0 %96
  %v98 = vld [vmem:[#allocation2] sm:$0xff]
  %v99 = vld [vmem:[#allocation2 + $0x8] sm:$0xff]
  %v100 = vmax.f32 %v98, %v95
  %v101 = vmax.f32 %v99, %v97
  %v102 = vsub.f32 %v98, %v100
  %v103 = vsub.f32 %v99, %v101
  %v104 = vmul.f32 %v102, 1.442695
  %v105 = vpow.pop %v104
  %v106 = vmul.f32 %v103, 1.442695
  %v107 = vpow.pop %v106
  %v108 = vld [vmem:[#allocation3] sm:$0xff]
  %v109 = vld [vmem:[#allocation3 + $0x8] sm:$0xff]
  %v110 = vmul.f32 %v105, %v108
  %v111 = vmul.f32 %v107, %v109
  %113 = vset.pattern.permute.xlu0 0
  %114 = vperm.xlu0 %113, %v100
  %v115 = vpop.permute.xlu0 %114
  %118 = vset.pattern.permute.xlu0 0
  %119 = vperm.xlu0 %118, %v101
  %v120 = vpop.permute.xlu0 %119
  %v122 = vsub.f32 %v90, %v115
  %v123 = vsub.f32 %v91, %v120
  %v124 = vmul.f32 %v122, 1.442695
  %v125 = vpow.pop %v124
  %v126 = vmul.f32 %v123, 1.442695
  %v127 = vpow.pop %v126
  %128 = vadd.xlane.f32.xlu0 %v125
  %v129 = vpop.xlane.xlu0 %128
  %130 = vadd.xlane.f32.xlu0 %v127
  %v131 = vpop.xlane.xlu0 %130
  %v132 = vadd.f32 %v110, %v129
  %v133 = vadd.f32 %v111, %v131
  %vm134 = vcmask 7168
  %135 = vst.msk [vmem:[#allocation3] sm:$0xff] %vm134, %v132
  %136 = vst.msk [vmem:[#allocation3 + $0x8] sm:$0xff] %vm134, %v133
  %137 = vst.msk [vmem:[#allocation2] sm:$0xff] %vm134, %v100
  %138 = vst.msk [vmem:[#allocation2 + $0x8] sm:$0xff] %vm134, %v101
  %s139 = smul.u32 0, 128
  %v140 = vstv %s139
  %v141 = vsub.s32 %v88, %v140
  %v142 = vsub.s32 %v89, %v140
  %143 = vset.pattern.permute.xlu0 0
  %144 = vperm.xlu0 %143, %v141
  %v145 = vpop.permute.xlu0 %144
  %146 = vset.pattern.permute.xlu0 0
  %147 = vperm.xlu0 %146, %v142
  %v148 = vpop.permute.xlu0 %147
  %vm149 = vcmp.eq.s32.totalorder %v93, %v145
  %vm150 = vcmp.eq.s32.totalorder %v93, %v148
  %v151 = vld [vmem:[#allocation4] sm:$0xff]
  %v152 = vld [vmem:[#allocation4 + $0x8] sm:$0xff]
  %v153 = vsel %vm149, %v90, 0.0
  %v154 = vsel %vm150, %v91, 0.0
  %155 = vadd.xlane.f32.xlu0 %v153
  %v156 = vpop.xlane.xlu0 %155
  %157 = vadd.xlane.f32.xlu0 %v154
  %v158 = vpop.xlane.xlu0 %157
  %v159 = vadd.f32 %v151, %v156
  %v160 = vadd.f32 %v152, %v158
  %161 = vst.msk [vmem:[#allocation4] sm:$0xff] %vm134, %v159
  %162 = vst.msk [vmem:[#allocation4 + $0x8] sm:$0xff] %vm134, %v160
  // Predicated region
  $region18: #{tpu_custom_call.1} parent=0 // pred_check
    %p163 = pneg %p68
  $region19: #{tpu_custom_call.1} parent=0 // pred_check_branch
    %165 = sbr.rel (%p163) target = $region21
  $region20: #{tpu_custom_call.1} parent=0 // pred_region
    %v166 = vld [vmem:[#allocation2] sm:$0xff]
    %v167 = vld [vmem:[#allocation2 + $0x8] sm:$0xff]
    %v168 = vld [vmem:[#allocation3] sm:$0xff]
    %v169 = vld [vmem:[#allocation3 + $0x8] sm:$0xff]
    %v170 = vlog2.pop %v168
    %v171 = vmul.f32 %v170, 0.6931472
    %v172 = vlog2.pop %v169
    %v173 = vmul.f32 %v172, 0.6931472
    %v174 = vadd.f32 %v166, %v171
    %v175 = vadd.f32 %v167, %v173
    %v176 = vld [vmem:[#allocation4] sm:$0xff]
    %v177 = vld [vmem:[#allocation4 + $0x8] sm:$0xff]
    %v178 = vsub.f32 %v174, %v176
    %v179 = vsub.f32 %v175, %v177
    %vm180 = vcmp.ne.s32.totalorder %v88, 0
    %vm181 = vcmp.ne.s32.totalorder %v89, 0
    %v182 = vld [vmem:[%s2] sm:$0xff]
    %v183 = vld [vmem:[%s2 + $0x8] sm:$0xff]
    %v184 = vsel %vm180, %v178, 0.0
    %v185 = vsel %vm181, %v179, 0.0
    %v186 = vadd.f32 %v182, %v184
    %v187 = vadd.f32 %v183, %v185
    %188 = vst.msk [vmem:[%s2] sm:$0xff] %vm134, %v186
    %189 = vst.msk [vmem:[%s2 + $0x8] sm:$0xff] %vm134, %v187
    %v190 = vld [vmem:[%s3] sm:$0xff]
    %v191 = vld [vmem:[%s3 + $0x8] sm:$0xff]
    %v192 = vsel %vm180, 1, 0
    %v193 = vsel %vm181, 1, 0
    %v194 = vcvt.s32.f32 %v192
    %v195 = vcvt.s32.f32 %v193
    %v196 = vadd.f32 %v190, %v194
    %v197 = vadd.f32 %v191, %v195
    %198 = vst.msk [vmem:[%s3] sm:$0xff] %vm134, %v196
    %199 = vst.msk [vmem:[%s3 + $0x8] sm:$0xff] %vm134, %v197
  $region21: #{tpu_custom_call.1} parent=0 // pred_fallthru
    _
  // Predicated region
  $region22: #{tpu_custom_call.1} parent=0 // pred_check
    _
  $region23: #{tpu_custom_call.1} parent=0 // pred_check_branch
    %201 = sbr.rel (0) target = $region25
  $region24: #{tpu_custom_call.1} parent=0 // pred_region
    _
  $region25: #{tpu_custom_call.1} parent=0 // pred_fallthru
    _
  // Predicated region
  $region26: #{tpu_custom_call.1} parent=0 // pred_check
    _
  $region27: #{tpu_custom_call.1} parent=0 // pred_check_branch
    %203 = sbr.rel (0) target = $region29
  $region28: #{tpu_custom_call.1} parent=0 // pred_region
    _
  $region29: #{tpu_custom_call.1} parent=0 // pred_fallthru
    _
  // Predicated region
  $region30: #{tpu_custom_call.1} parent=0 // pred_check
    _
  $region31: #{tpu_custom_call.1} parent=0 // pred_check_branch
    %205 = sbr.rel (0) target = $region33
  $region32: #{tpu_custom_call.1} parent=0 // pred_region
    _
  $region33: #{tpu_custom_call.1} parent=0 // pred_fallthru
    _
  // Predicated region
  $region34: #{tpu_custom_call.1} parent=0 // pred_check
    _
  $region35: #{tpu_custom_call.1} parent=0 // pred_check_branch
    %207 = sbr.rel (0) target = $region37
  $region36: #{tpu_custom_call.1} parent=0 // pred_region
    _
  $region37: #{tpu_custom_call.1} parent=0 // pred_fallthru
    _

</llo_original>
